<compile_context>
chip_gen: v7x
topology: tpu7x:2x2x1
jax: 0.10.0
libtpu: 0.0.40
codegen_flags: <defaults>
</compile_context>

<pallas_src>
import jax
import jax.numpy as jnp
import numpy as np
from jax import lax
from jax.experimental import pallas as pl
from jax.experimental.pallas import tpu as pltpu


def _round_up(x, m):
    return (x + m - 1) // m * m


def obs_kernel(p_ref, xb_ref, yb_ref, out_ref):
    """Accumulate per-cell particle counts for one particle tile.

    p_ref:   (2, TN)     f32  particle coords, lane-dense (row 0 = x, row 1 = y)
    xb_ref:  (NXP, 2)    f32  x-bin [lo, hi) bounds (padded bins: [+inf, -inf))
    yb_ref:  (NYP, 2)    f32  y-bin [lo, hi) bounds
    out_ref: (NXP, NYP)  i32  resident accumulator of per-(x-bin, y-bin) counts
    """
    t = pl.program_id(1)

    @pl.when(t == 0)
    def _init():
        out_ref[...] = jnp.zeros_like(out_ref)

    px = p_ref[0:1, :]                       # (1, TN)
    py = p_ref[1:2, :]                       # (1, TN)

    xlo = xb_ref[:, 0:1]                     # (NXP, 1)
    xhi = xb_ref[:, 1:2]
    ylo = yb_ref[:, 0:1]                     # (NYP, 1)
    yhi = yb_ref[:, 1:2]

    # Separable membership one-hots (direct compares, no subtractions; particles
    # lane-dense so every compare is a full-width VPU op).
    x_oh = ((px >= xlo) & (px < xhi)).astype(jnp.bfloat16)    # (NXP, TN)
    y_oh = ((py >= ylo) & (py < yhi)).astype(jnp.bfloat16)    # (NYP, TN)

    # counts[i, j] += sum_n x_oh[i, n] * y_oh[j, n]  -> contraction on the MXU.
    partial = lax.dot_general(
        x_oh, y_oh,
        dimension_numbers=(((1,), (1,)), ((), ())),
        preferred_element_type=jnp.float32)                    # (NXP, NYP), exact 0..TN
    out_ref[...] += partial.astype(jnp.int32)


class ObservationModel2D:
    """JAX/Pallas port of the PyTorch ObservationModel2D."""

    N_CORES = 2          # leading "parallel" grid axis (v7x megacore; harmless on 1-TC chips)
    TILE_N_MAX = 4096    # particle tile width (lanes); tiny VMEM footprint even on v7x
    _SUB = 8             # sublane granularity
    _LANE = 128          # lane granularity

    def __init__(self, min_coord=(1.0, 0.0), max_coord=(2.0, 1.0), n_cells=(8, 4)):
        self.nx, self.ny = int(n_cells[0]), int(n_cells[1])
        x_edges = np.linspace(min_coord[0], max_coord[0], self.nx + 1, dtype=np.float32)
        y_edges = np.linspace(min_coord[1], max_coord[1], self.ny + 1, dtype=np.float32)

        # Bin bounds padded to sublane multiples; padded bins use [+inf, -inf)
        # so they can never be hit.
        self.nxp = _round_up(self.nx, self._SUB)
        self.nyp = _round_up(self.ny, self._SUB)

        def make_bounds(edges, n, n_pad):
            b = np.empty((n_pad, 2), dtype=np.float32)
            b[:, 0] = np.inf
            b[:, 1] = -np.inf
            b[:n, 0] = edges[:-1]
            b[:n, 1] = edges[1:]
            return jnp.asarray(b)

        self.x_bounds = make_bounds(x_edges, self.nx, self.nxp)   # (NXP, 2)
        self.y_bounds = make_bounds(y_edges, self.ny, self.nyp)   # (NYP, 2)

        # Dense (2, C) bounds kept only for reference-checking parity with torch.
        X, Y = np.meshgrid(x_edges, y_edges, indexing="ij")
        self.min_coord = np.stack((X[:-1, :-1], Y[:-1, :-1])).reshape(2, -1).astype(np.float32)
        self.max_coord = np.stack((X[1:, 1:], Y[1:, 1:])).reshape(2, -1).astype(np.float32)

    def __call__(self, particles):
        particles = jnp.asarray(particles, dtype=jnp.float32)
        n = int(particles.shape[0])

        # Tile the particle axis: lane-aligned tile, padded so the 2 "cores"
        # each get an integer number of tiles.
        n_pad_min = _round_up(max(n, 1), self._LANE)
        tn = min(self.TILE_N_MAX, n_pad_min)
        n_total = _round_up(max(n, 1), self.N_CORES * tn)
        tiles_per_core = n_total // (self.N_CORES * tn)

        # Lane-dense layout (2, n_total); padded particles at +inf never count.
        p = jnp.full((2, n_total), jnp.inf, dtype=jnp.float32)
        p = p.at[:, :n].set(particles.T)

        nxp, nyp = self.nxp, self.nyp
        grid = (self.N_CORES, tiles_per_core)

        flops = (nxp + nyp) * n_total + 2 * nxp * nyp * n_total
        bytes_accessed = (p.size * 4
                          + (nxp + nyp) * 2 * 4
                          + self.N_CORES * nxp * nyp * 4)

        out = pl.pallas_call(
            obs_kernel,
            out_shape=jax.ShapeDtypeStruct((self.N_CORES * nxp, nyp), jnp.int32),
            grid=grid,
            in_specs=[
                # Particle tiles stream through; bounds stay VMEM-resident.
                pl.BlockSpec((2, tn), lambda c, t: (0, c * tiles_per_core + t)),
                pl.BlockSpec((nxp, 2), lambda c, t: (0, 0)),
                pl.BlockSpec((nyp, 2), lambda c, t: (0, 0)),
            ],
            # Same output block across t -> resident accumulator per core.
            out_specs=pl.BlockSpec((nxp, nyp), lambda c, t: (c, 0)),
            compiler_params=pltpu.CompilerParams(
                dimension_semantics=("parallel", "arbitrary")),
            cost_estimate=pl.CostEstimate(
                flops=flops, transcendentals=0, bytes_accessed=bytes_accessed),
        )(p, self.x_bounds, self.y_bounds)

        # Combine the per-core partial counts and strip bin padding.
        counts = out.reshape(self.N_CORES, nxp, nyp).sum(axis=0)
        return counts[: self.nx, : self.ny]


def _reference(particles, min_coord, max_coord, nx, ny):
    """Pure-numpy replica of the torch forward (dense, subtraction form)."""
    p = np.asarray(particles, dtype=np.float32)[:, :, None]      # (N, 2, 1)
    left = p - np.asarray(min_coord, dtype=np.float32)[None]     # (N, 2, C)
    right = np.asarray(max_coord, dtype=np.float32)[None] - p    # (N, 2, C)
    inside = np.all(np.logical_and(left >= 0, right > 0), axis=1)
    return inside.sum(axis=0).reshape(nx, ny)


if __name__ == "__main__":
    model = ObservationModel2D(min_coord=[1.0, 0.0], max_coord=[2.0, 1.0], n_cells=[8, 4])

    # Deterministic synthetic particles: N particles, 2 coordinates each.
    N = 64
    key = jax.random.PRNGKey(0)
    particles = jax.random.uniform(
        key, (N, 2),
        minval=jnp.array([0.8, -0.2], dtype=jnp.float32),   # some fall outside the grid
        maxval=jnp.array([2.2, 1.2], dtype=jnp.float32),
        dtype=jnp.float32,
    )

    out = jax.block_until_ready(model(particles))

    ref = _reference(particles, model.min_coord, model.max_coord, model.nx, model.ny)
    assert out.shape == (model.nx, model.ny), out.shape
    assert np.array_equal(np.asarray(out), ref), (np.asarray(out), ref)
    assert int(np.asarray(out).sum()) <= N

    print("KERNEL_OK")
</pallas_src>

<mosaic_0001>
module attributes {stable_mosaic.version = 11 : i64} {
  func.func @obs_kernel(%arg0: i32, %arg1: i32, %arg2: memref<2x128xf32, #tpu.memory_space<vmem>>, %arg3: memref<8x2xf32, #tpu.memory_space<vmem>>, %arg4: memref<8x2xf32, #tpu.memory_space<vmem>>, %arg5: memref<8x8xi32, #tpu.memory_space<vmem>>) attributes {dimension_semantics = [#tpu.dimension_semantics<parallel>, #tpu.dimension_semantics<arbitrary>], iteration_bounds = array<i64: 2, 1>, scalar_prefetch = 0 : i64, scratch_operands = 0 : i64, tpu.core_type = #tpu.core_type<tc>, window_params = [{transform_indices = @transform_0, window_bounds = array<i64: 2, 128>}, {pipeline_mode = #tpu.pipeline_mode<synchronous>, transform_indices = @transform_1, window_bounds = array<i64: 8, 2>}, {pipeline_mode = #tpu.pipeline_mode<synchronous>, transform_indices = @transform_2, window_bounds = array<i64: 8, 2>}, {transform_indices = @transform_3, window_bounds = array<i64: 8, 8>}]} {
    %c0_i32 = arith.constant 0 : i32
    %0 = arith.cmpi eq, %arg1, %c0_i32 : i32
    %1 = arith.extui %0 : i1 to i32
    %c0_i32_0 = arith.constant 0 : i32
    %2 = arith.cmpi ne, %1, %c0_i32_0 : i32
    scf.if %2 {
      %c0_i32_15 = arith.constant 0 : i32
      %34 = vector.broadcast %c0_i32_15 : i32 to vector<8x8xi32>
      %c0_16 = arith.constant 0 : index
      %c0_17 = arith.constant 0 : index
      %35 = vector.load %arg5[%c0_16, %c0_17] : memref<8x8xi32, #tpu.memory_space<vmem>>, vector<8x8xi32>
      tpu.vector_store %arg5[%c0_16, %c0_17], %34 {strides = array<i32>} : memref<8x8xi32, #tpu.memory_space<vmem>>, vector<8x8xi32>,
    } else {
    }
    %c0 = arith.constant 0 : index
    %c0_1 = arith.constant 0 : index
    %3 = vector.load %arg2[%c0, %c0_1] : memref<2x128xf32, #tpu.memory_space<vmem>>, vector<1x128xf32>
    %c1 = arith.constant 1 : index
    %c0_2 = arith.constant 0 : index
    %4 = vector.load %arg2[%c1, %c0_2] : memref<2x128xf32, #tpu.memory_space<vmem>>, vector<1x128xf32>
    %c0_3 = arith.constant 0 : index
    %c0_4 = arith.constant 0 : index
    %5 = vector.load %arg3[%c0_3, %c0_4] : memref<8x2xf32, #tpu.memory_space<vmem>>, vector<8x1xf32>
    %c0_5 = arith.constant 0 : index
    %c1_6 = arith.constant 1 : index
    %6 = vector.load %arg3[%c0_5, %c1_6] : memref<8x2xf32, #tpu.memory_space<vmem>>, vector<8x1xf32>
    %c0_7 = arith.constant 0 : index
    %c0_8 = arith.constant 0 : index
    %7 = vector.load %arg4[%c0_7, %c0_8] : memref<8x2xf32, #tpu.memory_space<vmem>>, vector<8x1xf32>
    %c0_9 = arith.constant 0 : index
    %c1_10 = arith.constant 1 : index
    %8 = vector.load %arg4[%c0_9, %c1_10] : memref<8x2xf32, #tpu.memory_space<vmem>>, vector<8x1xf32>
    %9 = vector.broadcast %3 : vector<1x128xf32> to vector<8x128xf32>
    %10 = vector.broadcast %5 : vector<8x1xf32> to vector<8x128xf32>
    %11 = arith.cmpf oge, %9, %10 : vector<8x128xf32>
    %12 = vector.broadcast %3 : vector<1x128xf32> to vector<8x128xf32>
    %13 = vector.broadcast %6 : vector<8x1xf32> to vector<8x128xf32>
    %14 = arith.cmpf olt, %12, %13 : vector<8x128xf32>
    %15 = arith.andi %11, %14 : vector<8x128xi1>
    %16 = arith.extui %15 : vector<8x128xi1> to vector<8x128xi32>
    %17 = arith.sitofp %16 : vector<8x128xi32> to vector<8x128xf32>
    %18 = arith.truncf %17 : vector<8x128xf32> to vector<8x128xbf16>
    %19 = vector.broadcast %4 : vector<1x128xf32> to vector<8x128xf32>
    %20 = vector.broadcast %7 : vector<8x1xf32> to vector<8x128xf32>
    %21 = arith.cmpf oge, %19, %20 : vector<8x128xf32>
    %22 = vector.broadcast %4 : vector<1x128xf32> to vector<8x128xf32>
    %23 = vector.broadcast %8 : vector<8x1xf32> to vector<8x128xf32>
    %24 = arith.cmpf olt, %22, %23 : vector<8x128xf32>
    %25 = arith.andi %21, %24 : vector<8x128xi1>
    %26 = arith.extui %25 : vector<8x128xi1> to vector<8x128xi32>
    %27 = arith.sitofp %26 : vector<8x128xi32> to vector<8x128xf32>
    %28 = arith.truncf %27 : vector<8x128xf32> to vector<8x128xbf16>
    %cst = arith.constant dense<0.000000e+00> : vector<8x8xf32>
    %29 = tpu.matmul %18, %28, %cst {dimension_numbers = #tpu.dot_dimension_numbers<[1], [1], [0], [0], [0, 0, 1, 0], [], []>} : vector<8x128xbf16>, vector<8x128xbf16>, vector<8x8xf32> -> vector<8x8xf32>
    %c0_11 = arith.constant 0 : index
    %c0_12 = arith.constant 0 : index
    %30 = vector.load %arg5[%c0_11, %c0_12] : memref<8x8xi32, #tpu.memory_space<vmem>>, vector<8x8xi32>
    %31 = arith.fptosi %29 : vector<8x8xf32> to vector<8x8xi32>
    %32 = arith.addi %30, %31 : vector<8x8xi32>
    %c0_13 = arith.constant 0 : index
    %c0_14 = arith.constant 0 : index
    %33 = vector.load %arg5[%c0_13, %c0_14] : memref<8x8xi32, #tpu.memory_space<vmem>>, vector<8x8xi32>
    tpu.vector_store %arg5[%c0_13, %c0_14], %32 {strides = array<i32>} : memref<8x8xi32, #tpu.memory_space<vmem>>, vector<8x8xi32>,
    return
  }
  func.func @transform_0(%arg0: i32, %arg1: i32) -> (i32, i32) {
    %c1_i32 = arith.constant 1 : i32
    %0 = arith.muli %arg0, %c1_i32 : i32
    %1 = arith.addi %0, %arg1 : i32
    %c0_i32 = arith.constant 0 : i32
    %c0_i32_0 = arith.constant 0 : i32
    return %c0_i32, %1 : i32, i32
  }
  func.func @transform_1(%arg0: i32, %arg1: i32) -> (i32, i32) {
    %c0_i32 = arith.constant 0 : i32
    %c0_i32_0 = arith.constant 0 : i32
    %c0_i32_1 = arith.constant 0 : i32
    return %c0_i32, %c0_i32_0 : i32, i32
  }
  func.func @transform_2(%arg0: i32, %arg1: i32) -> (i32, i32) {
    %c0_i32 = arith.constant 0 : i32
    %c0_i32_0 = arith.constant 0 : i32
    %c0_i32_1 = arith.constant 0 : i32
    return %c0_i32, %c0_i32_0 : i32, i32
  }
  func.func @transform_3(%arg0: i32, %arg1: i32) -> (i32, i32) {
    %c0_i32 = arith.constant 0 : i32
    %c0_i32_0 = arith.constant 0 : i32
    return %arg0, %c0_i32 : i32, i32
  }
}

</mosaic_0001>

<llo_original>
// kernel: tpu_custom_call.1
$region0: #{tpu_custom_call.1}
  #allocation0 [shape = 'u32[]', space=smem, size = 0x4, offset = 0x4, fixed_abs, tag = 'smem constant byte address 0x4 - core index']
  #allocation1 [shape = 'u32[144,128]{1,0:T(1,128)}', space=vmem, size = 0x12000, scoped, tag = 'internal scratch']
  %s0 = inlined_call_operand.vmem [shape: f32[2,256], index: 0, kind: input, shape index: {}]
  %s1 = inlined_call_operand.vmem [shape: f32[8,2], index: 1, kind: input, shape index: {}]
  %s2 = inlined_call_operand.vmem [shape: f32[8,2], index: 2, kind: input, shape index: {}]
  %s3 = inlined_call_operand.vmem [shape: s32[16,8], index: 3, kind: output, shape index: {}]
  %s4 = sld [smem:[#allocation0]]
  $region49: #{tpu_custom_call.1} parent=0
    _
  %s6 = ssub.s32 1, %s4
  %s7 = scalar_select 0, %s6, %s4
  loop: start=0, step=1, limit=4
  $region2: #{tpu_custom_call.1} parent=0 // loop_pre_header
    _
  $region3: #{tpu_custom_call.1} parent=0 // loop_header
    %s9 = sphi 0, %s13
    %p10 = scmp.ge.s32.totalorder %s9, 4
    %s16 = sphi 0, %s28
    %s17 = sphi 0, %s24
    %s18 = sphi 0, %s16
    %s19 = sphi 0, %s17
    %s20 = sphi 0, %s18
    %s21 = sphi 0, %s19
    %s33 = sphi 0, %s35
    %s36 = sphi 0, %s33
    %s37 = sphi 0, %s36
    %s53 = sphi 0, %s37
    %s57 = sphi 0, %s57
    %s59 = sphi 0, %s57
    %s60 = sphi 0, %s59
    %s74 = sphi 0, %s60
    %s78 = sphi 0, %s78
    %s80 = sphi 0, %s78
    %s81 = sphi 0, %s80
    %s95 = sphi 0, %s81
    %s101 = sphi 0, %s103
    %s104 = sphi 0, %s101
    %s105 = sphi 0, %s104
    %s121 = sphi 0, %s105
  $region4: #{tpu_custom_call.1} parent=0 // loop_header_branch
    %12 = sbr.rel (%p10) target = $region8
  $region5: #{tpu_custom_call.1} parent=0 // loop_body
    %s14 = ssub.s32 %s9, 1
    %s15 = ssub.s32 %s9, 2
    %s22 = sadd.s32 1, %s17
    %p23 = scmp.ge.s32.totalorder %s22, 1
    %s24 = scalar_select %p23, 0, %s22
    %s25 = sadd.s32 1, %s16
    %s26 = scalar_select %p23, %s25, %s16
    %p27 = scmp.ge.s32.totalorder %s26, 2
    %s28 = scalar_select %p27, 0, %s26
    %s29 = sadd.s32 %s16, %s17
    %s30 = sadd.s32 %s28, %s24
    %s31 = ssub.s32 %s29, %s30
    %p32 = scmp.eq.s32.totalorder %s31, 0
    %s34 = sadd.s32 %s33, 1
    %s35 = scalar_select %p32, %s33, %s34
    %p38 = pneg %p32
    %p39 = scmp.eq.s32.totalorder %s9, 1
    %p40 = por %p38, %p39
    %p41 = scmp.ne.s32.totalorder %s33, %s36
    %p42 = scmp.eq.s32.totalorder %s9, 0
    %p43 = por %p41, %p42
    %p44 = scmp.ne.s32.totalorder %s33, %s36
    %p45 = scmp.eq.s32.totalorder %s14, 1
    %p46 = por %p44, %p45
    %p47 = scmp.ne.s32.totalorder %s36, %s37
    %p48 = scmp.eq.s32.totalorder %s14, 0
    %p49 = por %p47, %p48
    %p50 = scmp.ne.s32.totalorder %s36, %s37
    %p51 = scmp.eq.s32.totalorder %s15, 1
    %p52 = por %p50, %p51
    %p54 = scmp.ne.s32.totalorder %s37, %s53
    %p55 = scmp.eq.s32.totalorder %s15, 0
    %p56 = por %p54, %p55
    %s58 = sadd.s32 %s57, 1
    %p61 = scmp.eq.s32.totalorder %s9, 1
    %p62 = scmp.ne.s32.totalorder %s57, %s59
    %p63 = scmp.eq.s32.totalorder %s9, 0
    %p64 = por %p62, %p63
    %p65 = scmp.ne.s32.totalorder %s57, %s59
    %p66 = scmp.eq.s32.totalorder %s14, 1
    %p67 = por %p65, %p66
    %p68 = scmp.ne.s32.totalorder %s59, %s60
    %p69 = scmp.eq.s32.totalorder %s14, 0
    %p70 = por %p68, %p69
    %p71 = scmp.ne.s32.totalorder %s59, %s60
    %p72 = scmp.eq.s32.totalorder %s15, 1
    %p73 = por %p71, %p72
    %p75 = scmp.ne.s32.totalorder %s60, %s74
    %p76 = scmp.eq.s32.totalorder %s15, 0
    %p77 = por %p75, %p76
    %s79 = sadd.s32 %s78, 1
    %p82 = scmp.eq.s32.totalorder %s9, 1
    %p83 = scmp.ne.s32.totalorder %s78, %s80
    %p84 = scmp.eq.s32.totalorder %s9, 0
    %p85 = por %p83, %p84
    %p86 = scmp.ne.s32.totalorder %s78, %s80
    %p87 = scmp.eq.s32.totalorder %s14, 1
    %p88 = por %p86, %p87
    %p89 = scmp.ne.s32.totalorder %s80, %s81
    %p90 = scmp.eq.s32.totalorder %s14, 0
    %p91 = por %p89, %p90
    %p92 = scmp.ne.s32.totalorder %s80, %s81
    %p93 = scmp.eq.s32.totalorder %s15, 1
    %p94 = por %p92, %p93
    %p96 = scmp.ne.s32.totalorder %s81, %s95
    %p97 = scmp.eq.s32.totalorder %s15, 0
    %p98 = por %p96, %p97
    %s99 = ssub.s32 %s16, %s28
    %p100 = scmp.eq.s32.totalorder %s99, 0
    %s102 = sadd.s32 %s101, 1
    %s103 = scalar_select %p100, %s101, %s102
    %p106 = pneg %p100
    %p107 = scmp.eq.s32.totalorder %s9, 1
    %p108 = por %p106, %p107
    %p109 = scmp.ne.s32.totalorder %s101, %s104
    %p110 = scmp.eq.s32.totalorder %s9, 0
    %p111 = por %p109, %p110
    %p112 = scmp.ne.s32.totalorder %s101, %s104
    %p113 = scmp.eq.s32.totalorder %s14, 1
    %p114 = por %p112, %p113
    %p115 = scmp.ne.s32.totalorder %s104, %s105
    %p116 = scmp.eq.s32.totalorder %s14, 0
    %p117 = por %p115, %p116
    %p118 = scmp.ne.s32.totalorder %s104, %s105
    %p119 = scmp.eq.s32.totalorder %s15, 1
    %p120 = por %p118, %p119
    %p122 = scmp.ne.s32.totalorder %s105, %s121
    %p123 = scmp.eq.s32.totalorder %s15, 0
    %p124 = por %p122, %p123
    %p125 = scmp.le.s32.totalorder 1, %s9
    %p126 = scmp.lt.s32.totalorder %s9, 3
    %p127 = pnand %p125, %p126
    %p128 = pneg %p127
    // Predicated region
    $region9: #{tpu_custom_call.1} parent=5 // pred_check
      _
    $region10: #{tpu_custom_call.1} parent=5 // pred_check_branch
      %130 = sbr.rel (%p127) target = $region12
    $region11: #{tpu_custom_call.1} parent=5 // pred_region
      %s131 = ssub.s32 %s9, 1
      // Predicated region
      $region13: #{tpu_custom_call.1} parent=11 // pred_check
        %p132 = pneg %p70
      $region14: #{tpu_custom_call.1} parent=11 // pred_check_branch
        %134 = sbr.rel (%p132) target = $region16
      $region15: #{tpu_custom_call.1} parent=11 // pred_region
        _
      $region16: #{tpu_custom_call.1} parent=11 // pred_fallthru
        _
      // Predicated region
      $region17: #{tpu_custom_call.1} parent=11 // pred_check
        %p135 = pneg %p91
      $region18: #{tpu_custom_call.1} parent=11 // pred_check_branch
        %137 = sbr.rel (%p135) target = $region20
      $region19: #{tpu_custom_call.1} parent=11 // pred_region
        _
      $region20: #{tpu_custom_call.1} parent=11 // pred_fallthru
        _
    $region12: #{tpu_custom_call.1} parent=5 // pred_fallthru
      _
    %p138 = scmp.lt.s32.totalorder %s9, 2
    // Predicated region
    $region21: #{tpu_custom_call.1} parent=5 // pred_check
      %p139 = pneg %p138
    $region22: #{tpu_custom_call.1} parent=5 // pred_check_branch
      %141 = sbr.rel (%p139) target = $region24
    $region23: #{tpu_custom_call.1} parent=5 // pred_region
      // Predicated region
      $region25: #{tpu_custom_call.1} parent=23 // pred_check
        %p142 = pneg %p43
      $region26: #{tpu_custom_call.1} parent=23 // pred_check_branch
        %144 = sbr.rel (%p142) target = $region28
      $region27: #{tpu_custom_call.1} parent=23 // pred_region
        %s145 = sadd.s32 %s16, %s17
        %p146 = scmp.lt.s32.totalorder %s145, 1
        %s147 = scalar_select %p146, %s145, 1
        %s148 = smul.addr %s147, 2
        %s149 = scalar_lea.vmem %s0, %s148
        %s150 = sadd.s32 %s16, %s17
      $region28: #{tpu_custom_call.1} parent=23 // pred_fallthru
        _
    $region24: #{tpu_custom_call.1} parent=5 // pred_fallthru
      _
    %p151 = scmp.le.s32.totalorder 1, %s9
    %p152 = scmp.lt.s32.totalorder %s9, 3
    %p153 = pnand %p151, %p152
    %p154 = pneg %p153
    // Predicated region
    $region29: #{tpu_custom_call.1} parent=5 // pred_check
      _
    $region30: #{tpu_custom_call.1} parent=5 // pred_check_branch
      %156 = sbr.rel (%p153) target = $region32
    $region31: #{tpu_custom_call.1} parent=5 // pred_region
      %s157 = ssub.s32 %s9, 1
      %s158 = sadd.s32 %s18, %s19
      %p159 = scmp.lt.s32.totalorder %s158, 1
      %s160 = scalar_select %p159, %s158, 1
      %s161 = smul.addr %s160, 2
      %s162 = scalar_lea.vmem %s0, %s161
      %p163 = pneg %p49
      %p164 = pneg %p46
      %p165 = pneg %p70
      %p166 = pneg %p67
      %p167 = pneg %p91
      %p168 = pneg %p88
      %p169 = pneg %p117
      %p170 = pneg %p114
      %p171 = scmp.lt.s32.totalorder %s18, 1
      %s172 = scalar_select %p171, %s18, 1
      %s173 = smul.addr %s172, 8
      %s174 = scalar_lea.vmem %s3, %s173
      %s175 = sadd.s32 %s18, %s19
      %p176 = scmp.lt.s32.totalorder %s175, 1
      %s177 = scalar_select %p176, %s175, 1
      %s178 = smul.addr %s177, 2
      %s179 = scalar_lea.vmem %s0, %s178
      %s180 = sadd.s32 %s18, %s19
      %p181 = scmp.lt.s32.totalorder %s18, 1
      %s182 = scalar_select %p181, %s18, 1
      %s183 = smul.addr %s182, 8
      %s184 = scalar_lea.vmem %s3, %s183
      %p186 = scmp.eq.s32.totalorder %s19, 0
      // Predicated region
      $region33: #{tpu_custom_call.1} parent=31 // pred_check
        %p187 = pneg %p186
      $region34: #{tpu_custom_call.1} parent=31 // pred_check_branch
        %189 = sbr.rel (%p187) target = $region36
      $region35: #{tpu_custom_call.1} parent=31 // pred_region
        %vm190 = vcmask 64512
        %191 = vst.msk [vmem:[%s184] sm:$0xff] %vm190, 0
      $region36: #{tpu_custom_call.1} parent=31 // pred_fallthru
        _
      %v192 = vld [vmem:[%s179] sm:$0x1]
      %v193 = vld [vmem:[%s179 + $0x1] sm:$0x1]
      %v194 = vld [vmem:[%s1] sm:$0xff]
      %v195 = vld [vmem:[%s2] sm:$0xff]
      %v196 = vlaneseq
      %v197 = vshrl.u32 %v196, 7
      %v198 = vsub.s32 0, %v197
      %v199 = vrot.slane %v192, %v198
      %201 = vset.pattern.permute.xlu0 0
      %202 = vperm.xlu0 %201, %v194
      %v203 = vpop.permute.xlu0 %202
      %vm205 = vcmp.ge.f32.partialorder %v199, %v203
      %206 = vset.pattern.permute.xlu0 1
      %207 = vperm.xlu0 %206, %v194
      %v208 = vpop.permute.xlu0 %207
      %vm210 = vcmp.lt.f32.partialorder %v199, %v208
      %vm211 = vmand %vm205, %vm210
      %v212 = vsel %vm211, 1, 0
      %v213 = vcvt.s32.f32 %v212
      %v214 = vpack.c.bf16 %v213, %v213
      %v215 = vlaneseq
      %v216 = vshrl.u32 %v215, 7
      %v217 = vsub.s32 0, %v216
      %v218 = vrot.slane %v193, %v217
      %220 = vset.pattern.permute.xlu0 0
      %221 = vperm.xlu0 %220, %v195
      %v222 = vpop.permute.xlu0 %221
      %vm224 = vcmp.ge.f32.partialorder %v218, %v222
      %225 = vset.pattern.permute.xlu0 1
      %226 = vperm.xlu0 %225, %v195
      %v227 = vpop.permute.xlu0 %226
      %vm229 = vcmp.lt.f32.partialorder %v218, %v227
      %vm230 = vmand %vm224, %vm229
      %v231 = vsel %vm230, 1, 0
      %v232 = vcvt.s32.f32 %v231
      %v233 = vpack.c.bf16 %v232, %v232
      %234 = vmatprep.subr.bf16.mxu0 0
      %235 = vmatpush1.bf16.xpose.msra.mxu0 %v233
      %236 = vmatprep.subr.bf16.mxu0 0
      %237 = vmatpush1.bf16.xpose.msra.mxu0 0
      %238 = vmatprep.subr.bf16.mxu0 0
      %239 = vmatpush1.bf16.xpose.msra.mxu0 0
      %240 = vmatprep.subr.bf16.mxu0 0
      %241 = vmatpush1.bf16.xpose.msra.mxu0 0
      %242 = vmatprep.subr.bf16.mxu0 0
      %243 = vmatpush1.bf16.xpose.msra.mxu0 0
      %244 = vmatprep.subr.bf16.mxu0 0
      %245 = vmatpush1.bf16.xpose.msra.mxu0 0
      %246 = vmatprep.subr.bf16.mxu0 0
      %247 = vmatpush1.bf16.xpose.msra.mxu0 0
      %248 = vmatprep.subr.bf16.mxu0 0
      %249 = vmatpush1.bf16.xpose.msra.mxu0 0
      %250 = vmatprep.subr.bf16.mxu0 0
      %251 = vmatpush1.bf16.xpose.msra.mxu0 0
      %252 = vmatprep.subr.bf16.mxu0 0
      %253 = vmatpush1.bf16.xpose.msra.mxu0 0
      %254 = vmatprep.subr.bf16.mxu0 0
      %255 = vmatpush1.bf16.xpose.msra.mxu0 0
      %256 = vmatprep.subr.bf16.mxu0 0
      %257 = vmatpush1.bf16.xpose.msra.mxu0 0
      %258 = vmatprep.subr.bf16.mxu0 0
      %259 = vmatpush1.bf16.xpose.msra.mxu0 0
      %260 = vmatprep.subr.bf16.mxu0 0
      %261 = vmatpush1.bf16.xpose.msra.mxu0 0
      %262 = vmatprep.subr.bf16.mxu0 0
      %263 = vmatpush1.bf16.xpose.msra.mxu0 0
      %264 = vmatprep.subr.bf16.mxu0 0
      %265 = vmatpush1.bf16.xpose.msra.mxu0 0
      %266 = vmatprep.mubr.bf16.mxu0 0
      %267 = vmatmul.mubr.bf16.gmra.mrb[0].mxu0 %v214
      %v268 = vpop.f32.mrb[0].mxu0
      %v269 = vadd.f32 0.0, %v268
      %v270 = vpop.f32.mrb[0].mxu0
      %v271 = vpop.f32.mrb[0].mxu0
      %v272 = vpop.f32.mrb[0].mxu0
      %273 = vdwg.mxu0
      %v274 = vld [vmem:[%s184] sm:$0xff]
      %v275 = vcvt.f32.s32.to.zero.pseudo %v269
      %v276 = vadd.s32 %v274, %v275
      %vm277 = vcmask 64512
      %278 = vst.msk [vmem:[%s184] sm:$0xff] %vm277, %v276
      %p279 = scmp.lt.s32.totalorder %s18, 1
      %s280 = scalar_select %p279, %s18, 1
      %s281 = smul.addr %s280, 8
      %s282 = scalar_lea.vmem %s3, %s281
      // Predicated region
      $region37: #{tpu_custom_call.1} parent=31 // pred_check
        %p283 = pneg %p114
      $region38: #{tpu_custom_call.1} parent=31 // pred_check_branch
        %285 = sbr.rel (%p283) target = $region40
      $region39: #{tpu_custom_call.1} parent=31 // pred_region
        _
      $region40: #{tpu_custom_call.1} parent=31 // pred_fallthru
        _
    $region32: #{tpu_custom_call.1} parent=5 // pred_fallthru
      _
    %p286 = scmp.le.s32.totalorder 2, %s9
    // Predicated region
    $region41: #{tpu_custom_call.1} parent=5 // pred_check
      %p287 = pneg %p286
    $region42: #{tpu_custom_call.1} parent=5 // pred_check_branch
      %289 = sbr.rel (%p287) target = $region44
    $region43: #{tpu_custom_call.1} parent=5 // pred_region
      %s290 = ssub.s32 %s9, 2
      // Predicated region
      $region45: #{tpu_custom_call.1} parent=43 // pred_check
        %p291 = pneg %p120
      $region46: #{tpu_custom_call.1} parent=43 // pred_check_branch
        %293 = sbr.rel (%p291) target = $region48
      $region47: #{tpu_custom_call.1} parent=43 // pred_region
        %p294 = scmp.lt.s32.totalorder %s20, 1
        %s295 = scalar_select %p294, %s20, 1
        %s296 = smul.addr %s295, 8
        %s297 = scalar_lea.vmem %s3, %s296
      $region48: #{tpu_custom_call.1} parent=43 // pred_fallthru
        _
    $region44: #{tpu_custom_call.1} parent=5 // pred_fallthru
      _
  $region6: #{tpu_custom_call.1} parent=0 // loop_footer
    %s13 = sadd.s32 1, %s9
  $region7: #{tpu_custom_call.1} parent=0 // loop_footer_branch
    %8 = sbr.rel target = $region3
  $region8: #{tpu_custom_call.1} parent=0 // loop_exit
    _

</llo_original>
